<compile_context>
chip_gen: v7x
topology: tpu7x:2x2x1
jax: 0.10.0
libtpu: 0.0.40
codegen_flags: <defaults>
</compile_context>

<pallas_src>
import numpy as np
import jax
import jax.numpy as jnp
from jax.experimental import pallas as pl
from jax.experimental.pallas import tpu as pltpu


def _round_up(x, m):
    return -(-x // m) * m


# ----------------------------------------------------------------------------
# Tiled matmul kernel:  C = A @ B  (+ bias row-broadcast)  (+ activation)
# ----------------------------------------------------------------------------
def _make_matmul_kernel(has_bias, act):
    def kernel(*refs):
        if has_bias:
            a_ref, b_ref, bias_ref, o_ref, acc_ref = refs
        else:
            a_ref, b_ref, o_ref, acc_ref = refs

        k = pl.program_id(2)

        @pl.when(k == 0)
        def _():
            acc_ref[...] = jnp.zeros_like(acc_ref)

        acc_ref[...] += jnp.dot(a_ref[...], b_ref[...],
                                preferred_element_type=jnp.float32)

        @pl.when(k == pl.num_programs(2) - 1)
        def _():
            z = acc_ref[...]
            if has_bias:
                z = z + bias_ref[...]
            if act == "relu":
                z = jnp.maximum(z, 0.0)
            elif act == "tanh":
                z = jnp.tanh(z)
            o_ref[...] = z.astype(o_ref.dtype)

    return kernel


def _pallas_matmul(a, b, bias=None, act=None):
    """C = a @ b (+ bias, + act).  a: (M, K), b: (K, N), bias: (N,) or None."""
    a = jnp.asarray(a, jnp.float32)
    b = jnp.asarray(b, jnp.float32)
    M, K = a.shape
    K2, N = b.shape
    assert K == K2

    # ---- tiling / padding: 8-aligned rows, lane-dense (128-padded) outputs
    tm = int(min(128, _round_up(M, 8)))
    m_pad = _round_up(M, tm)
    tn = 128
    n_pad = _round_up(N, tn)
    if K <= 512:
        k_pad = _round_up(K, 8)
        tk = k_pad
    else:
        k_pad = _round_up(K, 128)
        tk = 128
    gm, gn, gk = m_pad // tm, n_pad // tn, k_pad // tk

    a_p = jnp.pad(a, ((0, m_pad - M), (0, k_pad - K)))
    b_p = jnp.pad(b, ((0, k_pad - K), (0, n_pad - N)))

    in_specs = [
        pl.BlockSpec((tm, tk), lambda i, j, k: (i, k)),
        pl.BlockSpec((tk, tn), lambda i, j, k: (k, j)),
    ]
    operands = [a_p, b_p]
    has_bias = bias is not None
    if has_bias:
        bias_p = jnp.pad(jnp.asarray(bias, jnp.float32).reshape(1, N),
                         ((0, 0), (0, n_pad - N)))
        in_specs.append(pl.BlockSpec((1, tn), lambda i, j, k: (0, j)))
        operands.append(bias_p)

    out = pl.pallas_call(
        _make_matmul_kernel(has_bias, act),
        out_shape=jax.ShapeDtypeStruct((m_pad, n_pad), jnp.float32),
        grid_spec=pltpu.PrefetchScalarGridSpec(
            num_scalar_prefetch=0,
            grid=(gm, gn, gk),
            in_specs=in_specs,
            out_specs=pl.BlockSpec((tm, tn), lambda i, j, k: (i, j)),
            scratch_shapes=[pltpu.VMEM((tm, tn), jnp.float32)],
        ),
        compiler_params=pltpu.CompilerParams(
            dimension_semantics=("parallel", "parallel", "arbitrary")),
    )(*operands)

    return out[:M, :N]


# ----------------------------------------------------------------------------
# Host glue: dense D^-1/2 (A + I) D^-1/2  (GCNConv gcn_norm, flow src->tgt)
# ----------------------------------------------------------------------------
def _gcn_norm_dense(edge_index, num_nodes):
    ei = np.asarray(edge_index)
    row, col = ei[0].astype(np.int64), ei[1].astype(np.int64)
    mask = row != col                                   # add_remaining_self_loops
    row = np.concatenate([row[mask], np.arange(num_nodes)])
    col = np.concatenate([col[mask], np.arange(num_nodes)])
    w = np.ones(row.shape[0], np.float64)
    deg = np.zeros(num_nodes, np.float64)
    np.add.at(deg, col, w)
    dinv = np.where(deg > 0.0, deg ** -0.5, 0.0)
    norm = dinv[row] * w * dinv[col]
    a_hat = np.zeros((num_nodes, num_nodes), np.float64)
    np.add.at(a_hat, (col, row), norm)                  # out[col] += norm * x[row]
    return a_hat.astype(np.float32)


# ----------------------------------------------------------------------------
# GConv forward
# ----------------------------------------------------------------------------
def gconv_forward(x, edge_index, weight, bias, act=None, dropout=0.0,
                  training=False):
    """x: (N, F_in) float32; edge_index: (2, E) int; weight: (F_out, F_in);
    bias: (F_out,).  Returns (N, F_out) float32."""
    x = jnp.asarray(x, jnp.float32)
    weight = jnp.asarray(weight, jnp.float32)
    num_nodes, f_in = x.shape
    f_out = weight.shape[0]

    a_hat = jnp.asarray(_gcn_norm_dense(edge_index, num_nodes))

    if f_in <= f_out:
        # aggregate first: the O(N^2) matmul runs over the narrower feature dim
        m1 = _pallas_matmul(a_hat, x)
        z = _pallas_matmul(m1, weight.T, bias=bias, act=act)
    else:
        # PyG order: transform first, then aggregate (+ fused bias / activation)
        h = _pallas_matmul(x, weight.T)
        z = _pallas_matmul(a_hat, h, bias=bias, act=act)

    # F.dropout is identity for p == 0.0 or eval mode (the module default).
    if training and dropout > 0.0:
        # TODO(synk): train-mode dropout with pltpu PRNG not implemented.
        raise NotImplementedError("train-mode dropout not implemented")
    return z


# ----------------------------------------------------------------------------
# Pure numpy (float64) edge-level reference of GCNConv forward, for validation
# ----------------------------------------------------------------------------
def reference_forward(x, edge_index, weight, bias, act=None):
    x = np.asarray(x, np.float64)
    weight = np.asarray(weight, np.float64)
    bias = np.asarray(bias, np.float64)
    n = x.shape[0]
    ei = np.asarray(edge_index)
    row, col = ei[0].astype(np.int64), ei[1].astype(np.int64)
    mask = row != col
    row = np.concatenate([row[mask], np.arange(n)])
    col = np.concatenate([col[mask], np.arange(n)])
    w = np.ones(row.shape[0], np.float64)
    deg = np.zeros(n, np.float64)
    np.add.at(deg, col, w)
    dinv = np.where(deg > 0.0, deg ** -0.5, 0.0)
    norm = dinv[row] * w * dinv[col]
    h = x @ weight.T
    out = np.zeros((n, weight.shape[0]), np.float64)
    np.add.at(out, col, norm[:, None] * h[row])
    out = out + bias
    if act == "relu":
        out = np.maximum(out, 0.0)
    elif act == "tanh":
        out = np.tanh(out)
    return out


if __name__ == "__main__":
    key = jax.random.PRNGKey(0)
    num_nodes, num_edges = 200, 800
    f_in, f_out = 48, 64

    k_x, k_e, k_w, k_b, k_x2, k_w2, k_b2 = jax.random.split(key, 7)
    x = jax.random.normal(k_x, (num_nodes, f_in), jnp.float32)
    edge_index = jax.random.randint(k_e, (2, num_edges), 0, num_nodes, jnp.int32)
    weight = jax.random.normal(k_w, (f_out, f_in), jnp.float32) / np.sqrt(f_in)
    bias = jax.random.normal(k_b, (f_out,), jnp.float32) * 0.1

    # Default GConv configuration: act=None, dropout=0.0 (aggregate-first path).
    z = jax.block_until_ready(gconv_forward(x, edge_index, weight, bias, act=None))
    ref = reference_forward(x, edge_index, weight, bias, act=None)
    assert np.allclose(np.asarray(z), ref, rtol=2e-3, atol=2e-3), \
        float(np.max(np.abs(np.asarray(z) - ref)))

    # act='relu' and the transform-first branch (f_in > f_out).
    f_in2 = 96
    x2 = jax.random.normal(k_x2, (num_nodes, f_in2), jnp.float32)
    weight2 = jax.random.normal(k_w2, (f_out, f_in2), jnp.float32) / np.sqrt(f_in2)
    bias2 = jax.random.normal(k_b2, (f_out,), jnp.float32) * 0.1
    z2 = jax.block_until_ready(
        gconv_forward(x2, edge_index, weight2, bias2, act="relu"))
    ref2 = reference_forward(x2, edge_index, weight2, bias2, act="relu")
    assert np.allclose(np.asarray(z2), ref2, rtol=2e-3, atol=2e-3), \
        float(np.max(np.abs(np.asarray(z2) - ref2)))

    print("KERNEL_OK")
</pallas_src>

<mosaic_0001>
module attributes {stable_mosaic.version = 11 : i64} {
  func.func @kernel(%arg0: i32, %arg1: i32, %arg2: i32, %arg3: memref<128x200xf32, #tpu.memory_space<vmem>>, %arg4: memref<200x128xf32, #tpu.memory_space<vmem>>, %arg5: memref<128x128xf32, #tpu.memory_space<vmem>>, %arg6: memref<128x128xf32, #tpu.memory_space<vmem>>) attributes {dimension_semantics = [#tpu.dimension_semantics<parallel>, #tpu.dimension_semantics<parallel>, #tpu.dimension_semantics<arbitrary>], iteration_bounds = array<i64: 2, 1, 1>, scalar_prefetch = 0 : i64, scratch_operands = 1 : i64, tpu.core_type = #tpu.core_type<tc>, window_params = [{transform_indices = @transform_0, window_bounds = array<i64: 128, 200>}, {transform_indices = @transform_1, window_bounds = array<i64: 200, 128>}, {transform_indices = @transform_2, window_bounds = array<i64: 128, 128>}]} {
    %c0_i32 = arith.constant 0 : i32
    %0 = arith.cmpi eq, %arg2, %c0_i32 : i32
    %1 = arith.extui %0 : i1 to i32
    %c0_i32_0 = arith.constant 0 : i32
    %2 = arith.cmpi ne, %1, %c0_i32_0 : i32
    scf.if %2 {
      %cst_10 = arith.constant 0.000000e+00 : f32
      %12 = vector.broadcast %cst_10 : f32 to vector<128x128xf32>
      %c0_11 = arith.constant 0 : index
      %c0_12 = arith.constant 0 : index
      %13 = vector.load %arg6[%c0_11, %c0_12] : memref<128x128xf32, #tpu.memory_space<vmem>>, vector<128x128xf32>
      tpu.vector_store %arg6[%c0_11, %c0_12], %12 {strides = array<i32>} : memref<128x128xf32, #tpu.memory_space<vmem>>, vector<128x128xf32>,
    } else {
    }
    %c0 = arith.constant 0 : index
    %c0_1 = arith.constant 0 : index
    %3 = vector.load %arg6[%c0, %c0_1] : memref<128x128xf32, #tpu.memory_space<vmem>>, vector<128x128xf32>
    %c0_2 = arith.constant 0 : index
    %c0_3 = arith.constant 0 : index
    %4 = vector.load %arg3[%c0_2, %c0_3] : memref<128x200xf32, #tpu.memory_space<vmem>>, vector<128x200xf32>
    %c0_4 = arith.constant 0 : index
    %c0_5 = arith.constant 0 : index
    %5 = vector.load %arg4[%c0_4, %c0_5] : memref<200x128xf32, #tpu.memory_space<vmem>>, vector<200x128xf32>
    %cst = arith.constant dense<0.000000e+00> : vector<128x128xf32>
    %6 = tpu.matmul %4, %5, %cst {dimension_numbers = #tpu.dot_dimension_numbers<[1], [0], [0], [1], [0, 0, 1, 1], [], []>} : vector<128x200xf32>, vector<200x128xf32>, vector<128x128xf32> -> vector<128x128xf32>
    %7 = arith.addf %3, %6 : vector<128x128xf32>
    %c0_6 = arith.constant 0 : index
    %c0_7 = arith.constant 0 : index
    %8 = vector.load %arg6[%c0_6, %c0_7] : memref<128x128xf32, #tpu.memory_space<vmem>>, vector<128x128xf32>
    tpu.vector_store %arg6[%c0_6, %c0_7], %7 {strides = array<i32>} : memref<128x128xf32, #tpu.memory_space<vmem>>, vector<128x128xf32>,
    %c0_i32_8 = arith.constant 0 : i32
    %9 = arith.cmpi eq, %arg2, %c0_i32_8 : i32
    %10 = arith.extui %9 : i1 to i32
    %c0_i32_9 = arith.constant 0 : i32
    %11 = arith.cmpi ne, %10, %c0_i32_9 : i32
    scf.if %11 {
      %c0_10 = arith.constant 0 : index
      %c0_11 = arith.constant 0 : index
      %12 = vector.load %arg6[%c0_10, %c0_11] : memref<128x128xf32, #tpu.memory_space<vmem>>, vector<128x128xf32>
      %c0_12 = arith.constant 0 : index
      %c0_13 = arith.constant 0 : index
      %13 = vector.load %arg5[%c0_12, %c0_13] : memref<128x128xf32, #tpu.memory_space<vmem>>, vector<128x128xf32>
      tpu.vector_store %arg5[%c0_12, %c0_13], %12 {strides = array<i32>} : memref<128x128xf32, #tpu.memory_space<vmem>>, vector<128x128xf32>,
    } else {
    }
    return
  }
  func.func @transform_0(%arg0: i32, %arg1: i32, %arg2: i32) -> (i32, i32) {
    %c0_i32 = arith.constant 0 : i32
    return %arg0, %arg2 : i32, i32
  }
  func.func @transform_1(%arg0: i32, %arg1: i32, %arg2: i32) -> (i32, i32) {
    %c0_i32 = arith.constant 0 : i32
    return %arg2, %arg1 : i32, i32
  }
  func.func @transform_2(%arg0: i32, %arg1: i32, %arg2: i32) -> (i32, i32) {
    %c0_i32 = arith.constant 0 : i32
    return %arg0, %arg1 : i32, i32
  }
}

</mosaic_0001>

<llo_original>
// kernel: tpu_custom_call.1
$region0: #{tpu_custom_call.1}
  #allocation0 [shape = 'u32[]', space=smem, size = 0x4, offset = 0x4, fixed_abs, tag = 'smem constant byte address 0x4 - core index']
  #allocation1 [shape = 'u32[144,128]{1,0:T(1,128)}', space=vmem, size = 0x12000, scoped, tag = 'internal scratch']
  #allocation2 [shape = 'f32[128,128]{1,0:T(8,128)}', space=vmem, size = 0x10000, scoped, tag = 'scratch operand']
  %s0 = inlined_call_operand.vmem [shape: f32[256,200], index: 0, kind: input, shape index: {}]
  %s1 = inlined_call_operand.vmem [shape: f32[200,128], index: 1, kind: input, shape index: {}]
  %s2 = inlined_call_operand.hbm [shape: f32[256,128], index: 2, kind: output, shape index: {}]
  %s3 = sld [smem:[#allocation0]]
  $region49: #{tpu_custom_call.1} parent=0
    _
  %s5 = ssub.s32 1, %s3
  %s6 = scalar_select 0, %s5, %s3
  $region1: #{tpu_custom_call.1} parent=0
    #allocation3 [shape = 'u8[131072]{0}', space=vmem, size = 0x20000, scoped, tag = 'output window, operand 0']
    #allocation4 [shape = 's32[2]{0}', space=sflag, size = 0x8, scoped, tag = 'scoped memory for tpu_custom_call.1']
    %7 = vsyncpa [#allocation4], 0
    %s8 = scalar_lea.sflag [#allocation4], 1
    %9 = vsyncpa %s8, 0
    loop: start=0, step=1, limit=4
    $region2: #{tpu_custom_call.1} parent=1 // loop_pre_header
      _
    $region3: #{tpu_custom_call.1} parent=1 // loop_header
      %s11 = sphi 0, %s15
      %p12 = scmp.ge.s32.totalorder %s11, 4
      %s18 = sphi 0, %s37
      %s19 = sphi 0, %s33
      %s20 = sphi 0, %s29
      %s21 = sphi 0, %s18
      %s22 = sphi 0, %s19
      %s23 = sphi 0, %s20
      %s24 = sphi 0, %s21
      %s25 = sphi 0, %s22
      %s26 = sphi 0, %s23
      %s42 = sphi 0, %s44
      %s45 = sphi 0, %s42
      %s46 = sphi 0, %s45
      %s62 = sphi 0, %s46
      %s70 = sphi 0, %s72
      %s73 = sphi 0, %s70
      %s74 = sphi 0, %s73
      %s90 = sphi 0, %s74
      %s98 = sphi 0, %s100
      %s101 = sphi 0, %s98
      %s102 = sphi 0, %s101
      %s118 = sphi 0, %s102
    $region4: #{tpu_custom_call.1} parent=1 // loop_header_branch
      %14 = sbr.rel (%p12) target = $region8
    $region5: #{tpu_custom_call.1} parent=1 // loop_body
      %s16 = ssub.s32 %s11, 1
      %s17 = ssub.s32 %s11, 2
      %s27 = sadd.s32 1, %s20
      %p28 = scmp.ge.s32.totalorder %s27, 1
      %s29 = scalar_select %p28, 0, %s27
      %s30 = sadd.s32 1, %s19
      %s31 = scalar_select %p28, %s30, %s19
      %p32 = scmp.ge.s32.totalorder %s31, 1
      %s33 = scalar_select %p32, 0, %s31
      %s34 = sadd.s32 1, %s18
      %s35 = scalar_select %p32, %s34, %s18
      %p36 = scmp.ge.s32.totalorder %s35, 2
      %s37 = scalar_select %p36, 0, %s35
      %s38 = ssub.s32 %s18, %s37
      %s39 = ssub.s32 %s20, %s29
      %s40 = sor.u32 %s38, %s39
      %p41 = scmp.eq.s32.totalorder %s40, 0
      %s43 = sadd.s32 %s42, 1
      %s44 = scalar_select %p41, %s42, %s43
      %p47 = pneg %p41
      %p48 = scmp.eq.s32.totalorder %s11, 1
      %p49 = por %p47, %p48
      %p50 = scmp.ne.s32.totalorder %s42, %s45
      %p51 = scmp.eq.s32.totalorder %s11, 0
      %p52 = por %p50, %p51
      %p53 = scmp.ne.s32.totalorder %s42, %s45
      %p54 = scmp.eq.s32.totalorder %s16, 1
      %p55 = por %p53, %p54
      %p56 = scmp.ne.s32.totalorder %s45, %s46
      %p57 = scmp.eq.s32.totalorder %s16, 0
      %p58 = por %p56, %p57
      %p59 = scmp.ne.s32.totalorder %s45, %s46
      %p60 = scmp.eq.s32.totalorder %s17, 1
      %p61 = por %p59, %p60
      %p63 = scmp.ne.s32.totalorder %s46, %s62
      %p64 = scmp.eq.s32.totalorder %s17, 0
      %p65 = por %p63, %p64
      %s66 = ssub.s32 %s20, %s29
      %s67 = ssub.s32 %s19, %s33
      %s68 = sor.u32 %s66, %s67
      %p69 = scmp.eq.s32.totalorder %s68, 0
      %s71 = sadd.s32 %s70, 1
      %s72 = scalar_select %p69, %s70, %s71
      %p75 = pneg %p69
      %p76 = scmp.eq.s32.totalorder %s11, 1
      %p77 = por %p75, %p76
      %p78 = scmp.ne.s32.totalorder %s70, %s73
      %p79 = scmp.eq.s32.totalorder %s11, 0
      %p80 = por %p78, %p79
      %p81 = scmp.ne.s32.totalorder %s70, %s73
      %p82 = scmp.eq.s32.totalorder %s16, 1
      %p83 = por %p81, %p82
      %p84 = scmp.ne.s32.totalorder %s73, %s74
      %p85 = scmp.eq.s32.totalorder %s16, 0
      %p86 = por %p84, %p85
      %p87 = scmp.ne.s32.totalorder %s73, %s74
      %p88 = scmp.eq.s32.totalorder %s17, 1
      %p89 = por %p87, %p88
      %p91 = scmp.ne.s32.totalorder %s74, %s90
      %p92 = scmp.eq.s32.totalorder %s17, 0
      %p93 = por %p91, %p92
      %s94 = ssub.s32 %s18, %s37
      %s95 = ssub.s32 %s19, %s33
      %s96 = sor.u32 %s94, %s95
      %p97 = scmp.eq.s32.totalorder %s96, 0
      %s99 = sadd.s32 %s98, 1
      %s100 = scalar_select %p97, %s98, %s99
      %p103 = pneg %p97
      %p104 = scmp.eq.s32.totalorder %s11, 1
      %p105 = por %p103, %p104
      %p106 = scmp.ne.s32.totalorder %s98, %s101
      %p107 = scmp.eq.s32.totalorder %s11, 0
      %p108 = por %p106, %p107
      %p109 = scmp.ne.s32.totalorder %s98, %s101
      %p110 = scmp.eq.s32.totalorder %s16, 1
      %p111 = por %p109, %p110
      %p112 = scmp.ne.s32.totalorder %s101, %s102
      %p113 = scmp.eq.s32.totalorder %s16, 0
      %p114 = por %p112, %p113
      %p115 = scmp.ne.s32.totalorder %s101, %s102
      %p116 = scmp.eq.s32.totalorder %s17, 1
      %p117 = por %p115, %p116
      %p119 = scmp.ne.s32.totalorder %s102, %s118
      %p120 = scmp.eq.s32.totalorder %s17, 0
      %p121 = por %p119, %p120
      %p122 = scmp.le.s32.totalorder 1, %s11
      %p123 = scmp.lt.s32.totalorder %s11, 3
      %p124 = pnand %p122, %p123
      %p125 = pneg %p124
      // Predicated region
      $region9: #{tpu_custom_call.1} parent=5 // pred_check
        _
      $region10: #{tpu_custom_call.1} parent=5 // pred_check_branch
        %127 = sbr.rel (%p124) target = $region12
      $region11: #{tpu_custom_call.1} parent=5 // pred_region
        %s128 = ssub.s32 %s11, 1
        // Predicated region
        $region13: #{tpu_custom_call.1} parent=11 // pred_check
          %p129 = pneg %p86
        $region14: #{tpu_custom_call.1} parent=11 // pred_check_branch
          %131 = sbr.rel (%p129) target = $region16
        $region15: #{tpu_custom_call.1} parent=11 // pred_region
          %s132 = smul.u32 25, %s23
          %p133 = scmp.lt.s32.totalorder %s132, 24
          %s134 = scalar_select %p133, %s132, 24
          %p135 = scmp.lt.s32.totalorder %s22, 0
          %s136 = scalar_select %p135, %s22, 0
          %s137 = sadd.s32 %s136, %s134
          %s138 = smul.addr %s137, 8
          %s139 = scalar_lea.vmem %s1, %s138
          %s140 = smul.u32 25, %s23
        $region16: #{tpu_custom_call.1} parent=11 // pred_fallthru
          _
      $region12: #{tpu_custom_call.1} parent=5 // pred_fallthru
        _
      %p141 = scmp.lt.s32.totalorder %s11, 2
      // Predicated region
      $region17: #{tpu_custom_call.1} parent=5 // pred_check
        %p142 = pneg %p141
      $region18: #{tpu_custom_call.1} parent=5 // pred_check_branch
        %144 = sbr.rel (%p142) target = $region20
      $region19: #{tpu_custom_call.1} parent=5 // pred_region
        // Predicated region
        $region21: #{tpu_custom_call.1} parent=19 // pred_check
          %p145 = pneg %p52
        $region22: #{tpu_custom_call.1} parent=19 // pred_check_branch
          %147 = sbr.rel (%p145) target = $region24
        $region23: #{tpu_custom_call.1} parent=19 // pred_region
          %s148 = smul.u32 16, %s18
          %s149 = smul.u32 2, %s20
          %p150 = scmp.lt.s32.totalorder %s148, 31
          %s151 = scalar_select %p150, %s148, 31
          %p152 = scmp.lt.s32.totalorder %s149, 1
          %s153 = scalar_select %p152, %s149, 1
          %s154 = smul.addr %s151, 2
          %s155 = sadd.s32 %s153, %s154
          %s156 = smul.addr %s155, 8
          %s157 = scalar_lea.vmem %s0, %s156
          %s158 = smul.u32 16, %s18
          %s159 = smul.u32 2, %s20
        $region24: #{tpu_custom_call.1} parent=19 // pred_fallthru
          _
      $region20: #{tpu_custom_call.1} parent=5 // pred_fallthru
        _
      %p160 = scmp.le.s32.totalorder 1, %s11
      %p161 = scmp.lt.s32.totalorder %s11, 3
      %p162 = pnand %p160, %p161
      %p163 = pneg %p162
      // Predicated region
      $region25: #{tpu_custom_call.1} parent=5 // pred_check
        _
      $region26: #{tpu_custom_call.1} parent=5 // pred_check_branch
        %165 = sbr.rel (%p162) target = $region28
      $region27: #{tpu_custom_call.1} parent=5 // pred_region
        %s166 = ssub.s32 %s11, 1
        %s167 = smul.u32 16, %s21
        %s168 = smul.u32 2, %s23
        %p169 = scmp.lt.s32.totalorder %s167, 31
        %s170 = scalar_select %p169, %s167, 31
        %p171 = scmp.lt.s32.totalorder %s168, 1
        %s172 = scalar_select %p171, %s168, 1
        %s173 = smul.addr %s170, 2
        %s174 = sadd.s32 %s172, %s173
        %s175 = smul.addr %s174, 8
        %s176 = scalar_lea.vmem %s0, %s175
        %p177 = pneg %p58
        %p178 = pneg %p55
        %s179 = smul.u32 25, %s23
        %p180 = scmp.lt.s32.totalorder %s179, 24
        %s181 = scalar_select %p180, %s179, 24
        %p182 = scmp.lt.s32.totalorder %s22, 0
        %s183 = scalar_select %p182, %s22, 0
        %s184 = sadd.s32 %s183, %s181
        %s185 = smul.addr %s184, 8
        %s186 = scalar_lea.vmem %s1, %s185
        %p187 = pneg %p86
        %p188 = pneg %p83
        %p189 = pneg %p114
        %p190 = pneg %p111
        %s191 = sand.u32 %s101, 1
        %s192 = scalar_lea.sflag [#allocation4], %s191
        %s193 = sand.u32 %s101, 1
        %s194 = smul.addr %s193, 128
        %s195 = scalar_lea.vmem [#allocation3], %s194
        %s196 = smul.u32 16, %s21
        %s197 = smul.u32 2, %s23
        %p198 = scmp.lt.s32.totalorder %s196, 31
        %s199 = scalar_select %p198, %s196, 31
        %p200 = scmp.lt.s32.totalorder %s197, 1
        %s201 = scalar_select %p200, %s197, 1
        %s202 = smul.addr %s199, 2
        %s203 = sadd.s32 %s201, %s202
        %s204 = smul.addr %s203, 8
        %s205 = scalar_lea.vmem %s0, %s204
        %s206 = smul.u32 16, %s21
        %s207 = smul.u32 2, %s23
        %s208 = smul.u32 25, %s23
        %p209 = scmp.lt.s32.totalorder %s208, 24
        %s210 = scalar_select %p209, %s208, 24
        %p211 = scmp.lt.s32.totalorder %s22, 0
        %s212 = scalar_select %p211, %s22, 0
        %s213 = sadd.s32 %s212, %s210
        %s214 = smul.addr %s213, 8
        %s215 = scalar_lea.vmem %s1, %s214
        %s216 = smul.u32 25, %s23
        %s217 = smul.u32 16, %s21
        %p218 = scmp.eq.s32.totalorder %s23, 0
        // Predicated region
        $region29: #{tpu_custom_call.1} parent=27 // pred_check
          %p219 = pneg %p218
        $region30: #{tpu_custom_call.1} parent=27 // pred_check_branch
          %221 = sbr.rel (%p219) target = $region32
        $region31: #{tpu_custom_call.1} parent=27 // pred_region
          %222 = vst [vmem:[#allocation2] sm:$0xff] 0.0
          %223 = vst [vmem:[#allocation2 + $0x8] sm:$0xff] 0.0
          %224 = vst [vmem:[#allocation2 + $0x10] sm:$0xff] 0.0
          %225 = vst [vmem:[#allocation2 + $0x18] sm:$0xff] 0.0
          %226 = vst [vmem:[#allocation2 + $0x20] sm:$0xff] 0.0
          %227 = vst [vmem:[#allocation2 + $0x28] sm:$0xff] 0.0
          %228 = vst [vmem:[#allocation2 + $0x30] sm:$0xff] 0.0
          %229 = vst [vmem:[#allocation2 + $0x38] sm:$0xff] 0.0
          %230 = vst [vmem:[#allocation2 + $0x40] sm:$0xff] 0.0
          %231 = vst [vmem:[#allocation2 + $0x48] sm:$0xff] 0.0
          %232 = vst [vmem:[#allocation2 + $0x50] sm:$0xff] 0.0
          %233 = vst [vmem:[#allocation2 + $0x58] sm:$0xff] 0.0
          %234 = vst [vmem:[#allocation2 + $0x60] sm:$0xff] 0.0
          %235 = vst [vmem:[#allocation2 + $0x68] sm:$0xff] 0.0
          %236 = vst [vmem:[#allocation2 + $0x70] sm:$0xff] 0.0
          %237 = vst [vmem:[#allocation2 + $0x78] sm:$0xff] 0.0
        $region32: #{tpu_custom_call.1} parent=27 // pred_fallthru
          _
        %v238 = vld [vmem:[#allocation2] sm:$0xff]
        %v239 = vld [vmem:[#allocation2 + $0x8] sm:$0xff]
        %v240 = vld [vmem:[#allocation2 + $0x10] sm:$0xff]
        %v241 = vld [vmem:[#allocation2 + $0x18] sm:$0xff]
        %v242 = vld [vmem:[#allocation2 + $0x20] sm:$0xff]
        %v243 = vld [vmem:[#allocation2 + $0x28] sm:$0xff]
        %v244 = vld [vmem:[#allocation2 + $0x30] sm:$0xff]
        %v245 = vld [vmem:[#allocation2 + $0x38] sm:$0xff]
        %v246 = vld [vmem:[#allocation2 + $0x40] sm:$0xff]
        %v247 = vld [vmem:[#allocation2 + $0x48] sm:$0xff]
        %v248 = vld [vmem:[#allocation2 + $0x50] sm:$0xff]
        %v249 = vld [vmem:[#allocation2 + $0x58] sm:$0xff]
        %v250 = vld [vmem:[#allocation2 + $0x60] sm:$0xff]
        %v251 = vld [vmem:[#allocation2 + $0x68] sm:$0xff]
        %v252 = vld [vmem:[#allocation2 + $0x70] sm:$0xff]
        %v253 = vld [vmem:[#allocation2 + $0x78] sm:$0xff]
        %v254 = vld [vmem:[%s205] sm:$0xff]
        %v255 = vld [vmem:[%s205 + $0x8] sm:$0xff]
        %v256 = vld [vmem:[%s205 + $0x10] sm:$0xff]
        %v257 = vld [vmem:[%s205 + $0x18] sm:$0xff]
        %v258 = vld [vmem:[%s205 + $0x20] sm:$0xff]
        %v259 = vld [vmem:[%s205 + $0x28] sm:$0xff]
        %v260 = vld [vmem:[%s205 + $0x30] sm:$0xff]
        %v261 = vld [vmem:[%s205 + $0x38] sm:$0xff]
        %v262 = vld [vmem:[%s205 + $0x40] sm:$0xff]
        %v263 = vld [vmem:[%s205 + $0x48] sm:$0xff]
        %v264 = vld [vmem:[%s205 + $0x50] sm:$0xff]
        %v265 = vld [vmem:[%s205 + $0x58] sm:$0xff]
        %v266 = vld [vmem:[%s205 + $0x60] sm:$0xff]
        %v267 = vld [vmem:[%s205 + $0x68] sm:$0xff]
        %v268 = vld [vmem:[%s205 + $0x70] sm:$0xff]
        %v269 = vld [vmem:[%s205 + $0x78] sm:$0xff]
        %v270 = vld [vmem:[%s205 + $0x80] sm:$0xff]
        %v271 = vld [vmem:[%s205 + $0x88] sm:$0xff]
        %v272 = vld [vmem:[%s205 + $0x90] sm:$0xff]
        %v273 = vld [vmem:[%s205 + $0x98] sm:$0xff]
        %v274 = vld [vmem:[%s205 + $0xa0] sm:$0xff]
        %v275 = vld [vmem:[%s205 + $0xa8] sm:$0xff]
        %v276 = vld [vmem:[%s205 + $0xb0] sm:$0xff]
        %v277 = vld [vmem:[%s205 + $0xb8] sm:$0xff]
        %v278 = vld [vmem:[%s205 + $0xc0] sm:$0xff]
        %v279 = vld [vmem:[%s205 + $0xc8] sm:$0xff]
        %v280 = vld [vmem:[%s205 + $0xd0] sm:$0xff]
        %v281 = vld [vmem:[%s205 + $0xd8] sm:$0xff]
        %v282 = vld [vmem:[%s205 + $0xe0] sm:$0xff]
        %v283 = vld [vmem:[%s205 + $0xe8] sm:$0xff]
        %v284 = vld [vmem:[%s205 + $0xf0] sm:$0xff]
        %v285 = vld [vmem:[%s205 + $0xf8] sm:$0xff]
        %v286 = vld [vmem:[%s215] sm:$0xff]
        %v287 = vld [vmem:[%s215 + $0x8] sm:$0xff]
        %v288 = vld [vmem:[%s215 + $0x10] sm:$0xff]
        %v289 = vld [vmem:[%s215 + $0x18] sm:$0xff]
        %v290 = vld [vmem:[%s215 + $0x20] sm:$0xff]
        %v291 = vld [vmem:[%s215 + $0x28] sm:$0xff]
        %v292 = vld [vmem:[%s215 + $0x30] sm:$0xff]
        %v293 = vld [vmem:[%s215 + $0x38] sm:$0xff]
        %v294 = vld [vmem:[%s215 + $0x40] sm:$0xff]
        %v295 = vld [vmem:[%s215 + $0x48] sm:$0xff]
        %v296 = vld [vmem:[%s215 + $0x50] sm:$0xff]
        %v297 = vld [vmem:[%s215 + $0x58] sm:$0xff]
        %v298 = vld [vmem:[%s215 + $0x60] sm:$0xff]
        %v299 = vld [vmem:[%s215 + $0x68] sm:$0xff]
        %v300 = vld [vmem:[%s215 + $0x70] sm:$0xff]
        %v301 = vld [vmem:[%s215 + $0x78] sm:$0xff]
        %v302 = vld [vmem:[%s215 + $0x80] sm:$0xff]
        %v303 = vld [vmem:[%s215 + $0x88] sm:$0xff]
        %v304 = vld [vmem:[%s215 + $0x90] sm:$0xff]
        %v305 = vld [vmem:[%s215 + $0x98] sm:$0xff]
        %v306 = vld [vmem:[%s215 + $0xa0] sm:$0xff]
        %v307 = vld [vmem:[%s215 + $0xa8] sm:$0xff]
        %v308 = vld [vmem:[%s215 + $0xb0] sm:$0xff]
        %v309 = vld [vmem:[%s215 + $0xb8] sm:$0xff]
        %v310 = vld [vmem:[%s215 + $0xc0] sm:$0xff]
        %vm311 = vcmask 588800
        %v313 = vsel %vm311, %v255, 0
        %v316 = vsel %vm311, %v257, 0
        %v319 = vsel %vm311, %v259, 0
        %v322 = vsel %vm311, %v261, 0
        %v325 = vsel %vm311, %v263, 0
        %v328 = vsel %vm311, %v265, 0
        %v331 = vsel %vm311, %v267, 0
        %v334 = vsel %vm311, %v269, 0
        %v337 = vsel %vm311, %v271, 0
        %v340 = vsel %vm311, %v273, 0
        %v343 = vsel %vm311, %v275, 0
        %v346 = vsel %vm311, %v277, 0
        %v349 = vsel %vm311, %v279, 0
        %v352 = vsel %vm311, %v281, 0
        %v355 = vsel %vm311, %v283, 0
        %v358 = vsel %vm311, %v285, 0
        %360 = vmatprep.subr.mxu0 0.0
        %361 = vmatpush1.msra.mxu0 %v286
        %362 = vmatprep.subr.mxu0 0.0
        %363 = vmatpush1.msra.mxu0 %v287
        %364 = vmatprep.subr.mxu0 0.0
        %365 = vmatpush1.msra.mxu0 %v288
        %366 = vmatprep.subr.mxu0 0.0
        %367 = vmatpush1.msra.mxu0 %v289
        %368 = vmatprep.subr.mxu0 0.0
        %369 = vmatpush1.msra.mxu0 %v290
        %370 = vmatprep.subr.mxu0 0.0
        %371 = vmatpush1.msra.mxu0 %v291
        %372 = vmatprep.subr.mxu0 0.0
        %373 = vmatpush1.msra.mxu0 %v292
        %374 = vmatprep.subr.mxu0 0.0
        %375 = vmatpush1.msra.mxu0 %v293
        %376 = vmatprep.subr.mxu0 0.0
        %377 = vmatpush1.msra.mxu0 %v294
        %378 = vmatprep.subr.mxu0 0.0
        %379 = vmatpush1.msra.mxu0 %v295
        %380 = vmatprep.subr.mxu0 0.0
        %381 = vmatpush1.msra.mxu0 %v296
        %382 = vmatprep.subr.mxu0 0.0
        %383 = vmatpush1.msra.mxu0 %v297
        %384 = vmatprep.subr.mxu0 0.0
        %385 = vmatpush1.msra.mxu0 %v298
        %386 = vmatprep.subr.mxu0 0.0
        %387 = vmatpush1.msra.mxu0 %v299
        %388 = vmatprep.subr.mxu0 0.0
        %389 = vmatpush1.msra.mxu0 %v300
        %390 = vmatprep.subr.mxu0 0.0
        %391 = vmatpush1.msra.mxu0 %v301
        %392 = vmatprep.subr.mxu0 0.0
        %393 = vmatpush1.msra.mxu0 %v302
        %394 = vmatprep.subr.mxu0 0.0
        %395 = vmatpush1.msra.mxu0 %v303
        %396 = vmatprep.subr.mxu0 0.0
        %397 = vmatpush1.msra.mxu0 %v304
        %398 = vmatprep.subr.mxu0 0.0
        %399 = vmatpush1.msra.mxu0 %v305
        %400 = vmatprep.subr.mxu0 0.0
        %401 = vmatpush1.msra.mxu0 %v306
        %402 = vmatprep.subr.mxu0 0.0
        %403 = vmatpush1.msra.mxu0 %v307
        %404 = vmatprep.subr.mxu0 0.0
        %405 = vmatpush1.msra.mxu0 %v308
        %406 = vmatprep.subr.mxu0 0.0
        %407 = vmatpush1.msra.mxu0 %v309
        %408 = vmatprep.subr.mxu0 0.0
        %409 = vmatpush1.msra.mxu0 %v310
        %410 = vmatprep.subr.mxu0 0.0
        %411 = vmatpush1.msra.mxu0 0.0
        %412 = vmatprep.subr.mxu0 0.0
        %413 = vmatpush1.msra.mxu0 0.0
        %414 = vmatprep.subr.mxu0 0.0
        %415 = vmatpush1.msra.mxu0 0.0
        %416 = vmatprep.subr.mxu0 0.0
        %417 = vmatpush1.msra.mxu0 0.0
        %418 = vmatprep.subr.mxu0 0.0
        %419 = vmatpush1.msra.mxu0 0.0
        %420 = vmatprep.subr.mxu0 0.0
        %421 = vmatpush1.msra.mxu0 0.0
        %422 = vmatprep.subr.mxu0 0.0
        %423 = vmatpush1.msra.mxu0 0.0
        %424 = vmatprep.mubr.f32.mxu0 %v313
        %425 = vmatmul.mubr.f32.gmra.mrb[0].mxu0 %v254
        %v426 = vpop.f32.mrb[0].mxu0
        %v427 = vadd.f32 0.0, %v426
        %v428 = vpop.f32.mrb[0].mxu0
        %429 = vmatprep.mubr.f32.mxu0 %v316
        %430 = vmatmul.mubr.f32.gmra.mrb[0].mxu0 %v256
        %v431 = vpop.f32.mrb[0].mxu0
        %v432 = vadd.f32 0.0, %v431
        %v433 = vpop.f32.mrb[0].mxu0
        %434 = vmatprep.mubr.f32.mxu0 %v319
        %435 = vmatmul.mubr.f32.gmra.mrb[0].mxu0 %v258
        %v436 = vpop.f32.mrb[0].mxu0
        %v437 = vadd.f32 0.0, %v436
        %v438 = vpop.f32.mrb[0].mxu0
        %439 = vmatprep.mubr.f32.mxu0 %v322
        %440 = vmatmul.mubr.f32.gmra.mrb[0].mxu0 %v260
        %v441 = vpop.f32.mrb[0].mxu0
        %v442 = vadd.f32 0.0, %v441
        %v443 = vpop.f32.mrb[0].mxu0
        %444 = vmatprep.mubr.f32.mxu0 %v325
        %445 = vmatmul.mubr.f32.gmra.mrb[0].mxu0 %v262
        %v446 = vpop.f32.mrb[0].mxu0
        %v447 = vadd.f32 0.0, %v446
        %v448 = vpop.f32.mrb[0].mxu0
        %449 = vmatprep.mubr.f32.mxu0 %v328
        %450 = vmatmul.mubr.f32.gmra.mrb[0].mxu0 %v264
        %v451 = vpop.f32.mrb[0].mxu0
        %v452 = vadd.f32 0.0, %v451
        %v453 = vpop.f32.mrb[0].mxu0
        %454 = vmatprep.mubr.f32.mxu0 %v331
        %455 = vmatmul.mubr.f32.gmra.mrb[0].mxu0 %v266
        %v456 = vpop.f32.mrb[0].mxu0
        %v457 = vadd.f32 0.0, %v456
        %v458 = vpop.f32.mrb[0].mxu0
        %459 = vmatprep.mubr.f32.mxu0 %v334
        %460 = vmatmul.mubr.f32.gmra.mrb[0].mxu0 %v268
        %v461 = vpop.f32.mrb[0].mxu0
        %v462 = vadd.f32 0.0, %v461
        %v463 = vpop.f32.mrb[0].mxu0
        %464 = vmatprep.mubr.f32.mxu0 %v337
        %465 = vmatmul.mubr.f32.gmra.mrb[0].mxu0 %v270
        %v466 = vpop.f32.mrb[0].mxu0
        %v467 = vadd.f32 0.0, %v466
        %v468 = vpop.f32.mrb[0].mxu0
        %469 = vmatprep.mubr.f32.mxu0 %v340
        %470 = vmatmul.mubr.f32.gmra.mrb[0].mxu0 %v272
        %v471 = vpop.f32.mrb[0].mxu0
        %v472 = vadd.f32 0.0, %v471
        %v473 = vpop.f32.mrb[0].mxu0
        %474 = vmatprep.mubr.f32.mxu0 %v343
        %475 = vmatmul.mubr.f32.gmra.mrb[0].mxu0 %v274
        %v476 = vpop.f32.mrb[0].mxu0
        %v477 = vadd.f32 0.0, %v476
        %v478 = vpop.f32.mrb[0].mxu0
        %479 = vmatprep.mubr.f32.mxu0 %v346
        %480 = vmatmul.mubr.f32.gmra.mrb[0].mxu0 %v276
        %v481 = vpop.f32.mrb[0].mxu0
        %v482 = vadd.f32 0.0, %v481
        %v483 = vpop.f32.mrb[0].mxu0
        %484 = vmatprep.mubr.f32.mxu0 %v349
        %485 = vmatmul.mubr.f32.gmra.mrb[0].mxu0 %v278
        %v486 = vpop.f32.mrb[0].mxu0
        %v487 = vadd.f32 0.0, %v486
        %v488 = vpop.f32.mrb[0].mxu0
        %489 = vmatprep.mubr.f32.mxu0 %v352
        %490 = vmatmul.mubr.f32.gmra.mrb[0].mxu0 %v280
        %v491 = vpop.f32.mrb[0].mxu0
        %v492 = vadd.f32 0.0, %v491
        %v493 = vpop.f32.mrb[0].mxu0
        %494 = vmatprep.mubr.f32.mxu0 %v355
        %495 = vmatmul.mubr.f32.gmra.mrb[0].mxu0 %v282
        %v496 = vpop.f32.mrb[0].mxu0
        %v497 = vadd.f32 0.0, %v496
        %v498 = vpop.f32.mrb[0].mxu0
        %499 = vmatprep.mubr.f32.mxu0 %v358
        %500 = vmatmul.mubr.f32.gmra.mrb[0].mxu0 %v284
        %v501 = vpop.f32.mrb[0].mxu0
        %v502 = vadd.f32 0.0, %v501
        %v503 = vpop.f32.mrb[0].mxu0
        %504 = vdwg.mxu0
        %v505 = vadd.f32 %v238, %v427
        %v506 = vadd.f32 %v239, %v432
        %v507 = vadd.f32 %v240, %v437
        %v508 = vadd.f32 %v241, %v442
        %v509 = vadd.f32 %v242, %v447
        %v510 = vadd.f32 %v243, %v452
        %v511 = vadd.f32 %v244, %v457
        %v512 = vadd.f32 %v245, %v462
        %v513 = vadd.f32 %v246, %v467
        %v514 = vadd.f32 %v247, %v472
        %v515 = vadd.f32 %v248, %v477
        %v516 = vadd.f32 %v249, %v482
        %v517 = vadd.f32 %v250, %v487
        %v518 = vadd.f32 %v251, %v492
        %v519 = vadd.f32 %v252, %v497
        %v520 = vadd.f32 %v253, %v502
        %521 = vst [vmem:[#allocation2] sm:$0xff] %v505
        %522 = vst [vmem:[#allocation2 + $0x8] sm:$0xff] %v506
        %523 = vst [vmem:[#allocation2 + $0x10] sm:$0xff] %v507
        %524 = vst [vmem:[#allocation2 + $0x18] sm:$0xff] %v508
        %525 = vst [vmem:[#allocation2 + $0x20] sm:$0xff] %v509
        %526 = vst [vmem:[#allocation2 + $0x28] sm:$0xff] %v510
        %527 = vst [vmem:[#allocation2 + $0x30] sm:$0xff] %v511
        %528 = vst [vmem:[#allocation2 + $0x38] sm:$0xff] %v512
        %529 = vst [vmem:[#allocation2 + $0x40] sm:$0xff] %v513
        %530 = vst [vmem:[#allocation2 + $0x48] sm:$0xff] %v514
        %531 = vst [vmem:[#allocation2 + $0x50] sm:$0xff] %v515
        %532 = vst [vmem:[#allocation2 + $0x58] sm:$0xff] %v516
        %533 = vst [vmem:[#allocation2 + $0x60] sm:$0xff] %v517
        %534 = vst [vmem:[#allocation2 + $0x68] sm:$0xff] %v518
        %535 = vst [vmem:[#allocation2 + $0x70] sm:$0xff] %v519
        %536 = vst [vmem:[#allocation2 + $0x78] sm:$0xff] %v520
        // Predicated region
        $region33: #{tpu_custom_call.1} parent=27 // pred_check
          %p537 = pneg %p218
        $region34: #{tpu_custom_call.1} parent=27 // pred_check_branch
          %539 = sbr.rel (%p537) target = $region36
        $region35: #{tpu_custom_call.1} parent=27 // pred_region
          %v540 = vld [vmem:[#allocation2] sm:$0xff]
          %v541 = vld [vmem:[#allocation2 + $0x8] sm:$0xff]
          %v542 = vld [vmem:[#allocation2 + $0x10] sm:$0xff]
          %v543 = vld [vmem:[#allocation2 + $0x18] sm:$0xff]
          %v544 = vld [vmem:[#allocation2 + $0x20] sm:$0xff]
          %v545 = vld [vmem:[#allocation2 + $0x28] sm:$0xff]
          %v546 = vld [vmem:[#allocation2 + $0x30] sm:$0xff]
          %v547 = vld [vmem:[#allocation2 + $0x38] sm:$0xff]
          %v548 = vld [vmem:[#allocation2 + $0x40] sm:$0xff]
          %v549 = vld [vmem:[#allocation2 + $0x48] sm:$0xff]
          %v550 = vld [vmem:[#allocation2 + $0x50] sm:$0xff]
          %v551 = vld [vmem:[#allocation2 + $0x58] sm:$0xff]
          %v552 = vld [vmem:[#allocation2 + $0x60] sm:$0xff]
          %v553 = vld [vmem:[#allocation2 + $0x68] sm:$0xff]
          %v554 = vld [vmem:[#allocation2 + $0x70] sm:$0xff]
          %v555 = vld [vmem:[#allocation2 + $0x78] sm:$0xff]
          %556 = vst [vmem:[%s195] sm:$0xff] %v540
          %557 = vst [vmem:[%s195 + $0x8] sm:$0xff] %v541
          %558 = vst [vmem:[%s195 + $0x10] sm:$0xff] %v542
          %559 = vst [vmem:[%s195 + $0x18] sm:$0xff] %v543
          %560 = vst [vmem:[%s195 + $0x20] sm:$0xff] %v544
          %561 = vst [vmem:[%s195 + $0x28] sm:$0xff] %v545
          %562 = vst [vmem:[%s195 + $0x30] sm:$0xff] %v546
          %563 = vst [vmem:[%s195 + $0x38] sm:$0xff] %v547
          %564 = vst [vmem:[%s195 + $0x40] sm:$0xff] %v548
          %565 = vst [vmem:[%s195 + $0x48] sm:$0xff] %v549
          %566 = vst [vmem:[%s195 + $0x50] sm:$0xff] %v550
          %567 = vst [vmem:[%s195 + $0x58] sm:$0xff] %v551
          %568 = vst [vmem:[%s195 + $0x60] sm:$0xff] %v552
          %569 = vst [vmem:[%s195 + $0x68] sm:$0xff] %v553
          %570 = vst [vmem:[%s195 + $0x70] sm:$0xff] %v554
          %571 = vst [vmem:[%s195 + $0x78] sm:$0xff] %v555
        $region36: #{tpu_custom_call.1} parent=27 // pred_fallthru
          _
        %s572 = sand.u32 %s101, 1
        %s573 = scalar_lea.sflag [#allocation4], %s572
        %s574 = sand.u32 %s101, 1
        %s575 = smul.addr %s574, 128
        %s576 = scalar_lea.vmem [#allocation3], %s575
        // Predicated region
        $region37: #{tpu_custom_call.1} parent=27 // pred_check
          %p577 = pneg %p111
        $region38: #{tpu_custom_call.1} parent=27 // pred_check_branch
          %579 = sbr.rel (%p577) target = $region40
        $region39: #{tpu_custom_call.1} parent=27 // pred_region
          %s580 = smul.u32 16, %s21
          %s582 = ssub.s32 2048, 2048
          %583 = vsyncadd %s573, %s582
          %s584 = sadd.s32 %s22, %s580
          %s585 = smul.addr %s584, 128
          %s586 = scalar_lea.hbm %s2, %s585
          %s587 = sshll.u32 %s576, 4
          %s588 = int_to_ptr.vmem [resolvable:$true] %s587
          %593 = dma.vmem_to_hbm [thread:$0]  %s588, 2048, %s586, %s573, 128, 128, 8
        $region40: #{tpu_custom_call.1} parent=27 // pred_fallthru
          _
      $region28: #{tpu_custom_call.1} parent=5 // pred_fallthru
        _
      %p594 = scmp.le.s32.totalorder 2, %s11
      // Predicated region
      $region41: #{tpu_custom_call.1} parent=5 // pred_check
        %p595 = pneg %p594
      $region42: #{tpu_custom_call.1} parent=5 // pred_check_branch
        %597 = sbr.rel (%p595) target = $region44
      $region43: #{tpu_custom_call.1} parent=5 // pred_region
        %s598 = ssub.s32 %s11, 2
        // Predicated region
        $region45: #{tpu_custom_call.1} parent=43 // pred_check
          %p599 = pneg %p117
        $region46: #{tpu_custom_call.1} parent=43 // pred_check_branch
          %601 = sbr.rel (%p599) target = $region48
        $region47: #{tpu_custom_call.1} parent=43 // pred_region
          %s602 = sand.u32 %s102, 1
          %s603 = scalar_lea.sflag [#allocation4], %s602
          %s604 = sand.u32 %s102, 1
          %s605 = smul.addr %s604, 128
          %s606 = scalar_lea.vmem [#allocation3], %s605
          %607 = dma.done %s603, 2048
        $region48: #{tpu_custom_call.1} parent=43 // pred_fallthru
          _
      $region44: #{tpu_custom_call.1} parent=5 // pred_fallthru
        _
    $region6: #{tpu_custom_call.1} parent=1 // loop_footer
      %s15 = sadd.s32 1, %s11
    $region7: #{tpu_custom_call.1} parent=1 // loop_footer_branch
      %10 = sbr.rel target = $region3
    $region8: #{tpu_custom_call.1} parent=1 // loop_exit
      _
    %608 = vsyncpa [#allocation4], 1
    %s609 = scalar_lea.sflag [#allocation4], 1
    %610 = vsyncpa %s609, 1

</llo_original>
